<compile_context>
chip_gen: v7x
topology: tpu7x:2x2x1
jax: 0.10.0
libtpu: 0.0.40
codegen_flags: <defaults>
</compile_context>

<pallas_src>
import jax
import jax.numpy as jnp
from jax.experimental import pallas as pl
from jax.experimental.pallas import tpu as pltpu

LATENT_DIM = 32          # cfg.latent_dim is not defined in the spec; pick a small value
HIDDEN = 256
NUM_CLASSES = 2
OUT_PAD = 128            # lane-dense padded class axis
NEG_SLOPE = 0.01         # nn.LeakyReLU default
NEG_INF = -1e30          # bias for padded (fake) classes -> exp() == 0


def _disc_kernel(x_ref, w1_ref, b1_ref, w2_ref, b2_ref, out_ref):
    # ---- linear1: (TB, D) @ (D, H) on the MXU, bf16 operands, f32 accum ----
    x = x_ref[...].astype(jnp.bfloat16)
    h = jnp.dot(x, w1_ref[...], preferred_element_type=jnp.float32)
    h = h + b1_ref[...]                                    # (1, H) broadcast

    # ---- LeakyReLU(0.01) ----
    h = jnp.where(h >= 0.0, h, NEG_SLOPE * h)

    # ---- linear2: (TB, H) @ (H, 128-padded) ----
    logits = jnp.dot(h.astype(jnp.bfloat16), w2_ref[...],
                     preferred_element_type=jnp.float32)
    logits = logits + b2_ref[...]                          # pad cols get -1e30

    # ---- softmax over the (padded) class axis; pads contribute exp()=0 ----
    m = jnp.max(logits, axis=-1, keepdims=True)
    e = jnp.exp(logits - m)
    s = jnp.sum(e, axis=-1, keepdims=True)
    out_ref[...] = e * pl.reciprocal(s, approx=True)


def discriminator_forward(x, params):
    """x: (B, latent_dim) f32  ->  (B, 2) softmax probabilities."""
    w1, b1, w2p, b2p = params
    B, D = x.shape

    # batch tile: multiple of 8 sublanes, up to 128 rows per grid step
    TB = 128 if B >= 128 else max(8, ((B + 7) // 8) * 8)
    Bp = pl.cdiv(B, TB) * TB
    xp = x if Bp == B else jnp.pad(x, ((0, Bp - B), (0, 0)))

    out = pl.pallas_call(
        _disc_kernel,
        out_shape=jax.ShapeDtypeStruct((Bp, OUT_PAD), jnp.float32),
        grid_spec=pltpu.PrefetchScalarGridSpec(
            num_scalar_prefetch=0,
            grid=(Bp // TB,),
            in_specs=[
                pl.BlockSpec((TB, D), lambda i: (i, 0)),            # x tile
                pl.BlockSpec((D, HIDDEN), lambda i: (0, 0)),        # W1 (resident)
                pl.BlockSpec((1, HIDDEN), lambda i: (0, 0)),        # b1
                pl.BlockSpec((HIDDEN, OUT_PAD), lambda i: (0, 0)),  # W2 (padded)
                pl.BlockSpec((1, OUT_PAD), lambda i: (0, 0)),       # b2 (padded)
            ],
            out_specs=pl.BlockSpec((TB, OUT_PAD), lambda i: (i, 0)),
        ),
        compiler_params=pltpu.CompilerParams(
            dimension_semantics=("parallel",)),
    )(xp, w1, b1, w2p, b2p)

    return out[:B, :NUM_CLASSES]


def init_discriminator_params(key, latent_dim=LATENT_DIM, hidden=HIDDEN,
                              num_classes=NUM_CLASSES):
    """Deterministic params mirroring nn.Linear default init (U(-1/sqrt(fan_in), ...))."""
    k1, k2, k3, k4 = jax.random.split(key, 4)
    bound1 = 1.0 / (latent_dim ** 0.5)
    W1 = jax.random.uniform(k1, (hidden, latent_dim), jnp.float32, -bound1, bound1)
    b1 = jax.random.uniform(k2, (hidden,), jnp.float32, -bound1, bound1)
    bound2 = 1.0 / (hidden ** 0.5)
    W2 = jax.random.uniform(k3, (num_classes, hidden), jnp.float32, -bound2, bound2)
    b2 = jax.random.uniform(k4, (num_classes,), jnp.float32, -bound2, bound2)

    # pre-transpose to (in, out); pad class axis to lane-dense 128
    w1 = jnp.transpose(W1).astype(jnp.bfloat16)                       # (D, H)
    b1 = b1.reshape(1, hidden).astype(jnp.float32)                    # (1, H)
    w2p = jnp.zeros((hidden, OUT_PAD), jnp.float32)
    w2p = w2p.at[:, :num_classes].set(jnp.transpose(W2)).astype(jnp.bfloat16)
    b2p = jnp.full((OUT_PAD,), NEG_INF, jnp.float32)
    b2p = b2p.at[:num_classes].set(b2).reshape(1, OUT_PAD)
    return (w1, b1, w2p, b2p)


def _reference_forward(x, params):
    """Plain-JAX reference (same bf16 matmul precision) for a sanity check."""
    w1, b1, w2p, b2p = params
    h = jnp.dot(x.astype(jnp.bfloat16), w1,
                preferred_element_type=jnp.float32) + b1
    h = jnp.where(h >= 0.0, h, NEG_SLOPE * h)
    logits = jnp.dot(h.astype(jnp.bfloat16), w2p,
                     preferred_element_type=jnp.float32) + b2p
    logits = logits[:, :NUM_CLASSES]
    return jax.nn.softmax(logits, axis=1)


if __name__ == "__main__":
    key = jax.random.PRNGKey(0)
    k_x, k_p = jax.random.split(key)

    B = 2
    x = jax.random.normal(k_x, (B, LATENT_DIM), jnp.float32)
    params = init_discriminator_params(k_p)

    out = jax.jit(discriminator_forward)(x, params)
    out = jax.block_until_ready(out)

    assert out.shape == (B, NUM_CLASSES), out.shape
    assert bool(jnp.all(jnp.isfinite(out)))
    # probabilities: each row sums to ~1 (approx reciprocal -> loose tol)
    assert bool(jnp.all(jnp.abs(jnp.sum(out, axis=1) - 1.0) < 1e-2))
    # match the plain-JAX reference
    ref = _reference_forward(x, params)
    assert bool(jnp.all(jnp.abs(out - ref) < 1e-2))

    print("KERNEL_OK")
</pallas_src>

<mosaic_0001>
module attributes {stable_mosaic.version = 11 : i64} {
  func.func @_disc_kernel(%arg0: i32, %arg1: memref<8x32xf32, #tpu.memory_space<vmem>>, %arg2: memref<32x256xbf16, #tpu.memory_space<vmem>>, %arg3: memref<1x256xf32, #tpu.memory_space<vmem>>, %arg4: memref<256x128xbf16, #tpu.memory_space<vmem>>, %arg5: memref<1x128xf32, #tpu.memory_space<vmem>>, %arg6: memref<8x128xf32, #tpu.memory_space<vmem>>) attributes {dimension_semantics = [#tpu.dimension_semantics<parallel>], iteration_bounds = array<i64: 1>, scalar_prefetch = 0 : i64, scratch_operands = 0 : i64, tpu.core_type = #tpu.core_type<tc>, window_params = [{transform_indices = @transform_0, window_bounds = array<i64: 8, 32>}, {pipeline_mode = #tpu.pipeline_mode<synchronous>, transform_indices = @transform_1, window_bounds = array<i64: 32, 256>}, {pipeline_mode = #tpu.pipeline_mode<synchronous>, transform_indices = @transform_2, window_bounds = array<i64: 1, 256>}, {pipeline_mode = #tpu.pipeline_mode<synchronous>, transform_indices = @transform_3, window_bounds = array<i64: 256, 128>}, {pipeline_mode = #tpu.pipeline_mode<synchronous>, transform_indices = @transform_4, window_bounds = array<i64: 1, 128>}, {transform_indices = @transform_5, window_bounds = array<i64: 8, 128>}]} {
    %c0 = arith.constant 0 : index
    %c0_0 = arith.constant 0 : index
    %0 = vector.load %arg1[%c0, %c0_0] : memref<8x32xf32, #tpu.memory_space<vmem>>, vector<8x32xf32>
    %1 = arith.truncf %0 : vector<8x32xf32> to vector<8x32xbf16>
    %c0_1 = arith.constant 0 : index
    %c0_2 = arith.constant 0 : index
    %2 = vector.load %arg2[%c0_1, %c0_2] : memref<32x256xbf16, #tpu.memory_space<vmem>>, vector<32x256xbf16>
    %cst = arith.constant dense<0.000000e+00> : vector<8x256xf32>
    %3 = tpu.matmul %1, %2, %cst {dimension_numbers = #tpu.dot_dimension_numbers<[1], [0], [0], [1], [0, 0, 1, 1], [], []>} : vector<8x32xbf16>, vector<32x256xbf16>, vector<8x256xf32> -> vector<8x256xf32>
    %c0_3 = arith.constant 0 : index
    %c0_4 = arith.constant 0 : index
    %4 = vector.load %arg3[%c0_3, %c0_4] : memref<1x256xf32, #tpu.memory_space<vmem>>, vector<1x256xf32>
    %5 = vector.broadcast %4 : vector<1x256xf32> to vector<8x256xf32>
    %6 = arith.addf %3, %5 : vector<8x256xf32>
    %cst_5 = arith.constant 0.000000e+00 : f32
    %7 = vector.broadcast %cst_5 : f32 to vector<8x256xf32>
    %8 = arith.cmpf oge, %6, %7 : vector<8x256xf32>
    %cst_6 = arith.constant 0.00999999977 : f32
    %9 = vector.broadcast %cst_6 : f32 to vector<8x256xf32>
    %10 = arith.mulf %9, %6 : vector<8x256xf32>
    %11 = arith.select %8, %6, %10 : vector<8x256xi1>, vector<8x256xf32>
    %12 = arith.truncf %11 : vector<8x256xf32> to vector<8x256xbf16>
    %c0_7 = arith.constant 0 : index
    %c0_8 = arith.constant 0 : index
    %13 = vector.load %arg4[%c0_7, %c0_8] : memref<256x128xbf16, #tpu.memory_space<vmem>>, vector<256x128xbf16>
    %cst_9 = arith.constant dense<0.000000e+00> : vector<8x128xf32>
    %14 = tpu.matmul %12, %13, %cst_9 {dimension_numbers = #tpu.dot_dimension_numbers<[1], [0], [0], [1], [0, 0, 1, 1], [], []>} : vector<8x256xbf16>, vector<256x128xbf16>, vector<8x128xf32> -> vector<8x128xf32>
    %c0_10 = arith.constant 0 : index
    %c0_11 = arith.constant 0 : index
    %15 = vector.load %arg5[%c0_10, %c0_11] : memref<1x128xf32, #tpu.memory_space<vmem>>, vector<1x128xf32>
    %16 = vector.broadcast %15 : vector<1x128xf32> to vector<8x128xf32>
    %17 = arith.addf %14, %16 : vector<8x128xf32>
    %cst_12 = arith.constant dense<0xFF800000> : vector<8xf32>
    %18 = vector.multi_reduction <maximumf>, %17, %cst_12 [1] : vector<8x128xf32> to vector<8xf32>
    %19 = vector.shape_cast %18 : vector<8xf32> to vector<8x1xf32>
    %20 = vector.broadcast %19 : vector<8x1xf32> to vector<8x128xf32>
    %21 = arith.subf %17, %20 : vector<8x128xf32>
    %22 = math.exp %21 : vector<8x128xf32>
    %cst_13 = arith.constant dense<0.000000e+00> : vector<8xf32>
    %23 = vector.multi_reduction <add>, %22, %cst_13 [1] : vector<8x128xf32> to vector<8xf32>
    %24 = vector.shape_cast %23 : vector<8xf32> to vector<8x1xf32>
    %25 = tpu.reciprocal %24 {approx = true} : vector<8x1xf32> -> vector<8x1xf32>
    %26 = vector.broadcast %25 : vector<8x1xf32> to vector<8x128xf32>
    %27 = arith.mulf %22, %26 : vector<8x128xf32>
    %c0_14 = arith.constant 0 : index
    %c0_15 = arith.constant 0 : index
    %28 = vector.load %arg6[%c0_14, %c0_15] : memref<8x128xf32, #tpu.memory_space<vmem>>, vector<8x128xf32>
    tpu.vector_store %arg6[%c0_14, %c0_15], %27 {strides = array<i32>} : memref<8x128xf32, #tpu.memory_space<vmem>>, vector<8x128xf32>,
    return
  }
  func.func @transform_0(%arg0: i32) -> (i32, i32) {
    %c0_i32 = arith.constant 0 : i32
    %c0_i32_0 = arith.constant 0 : i32
    return %arg0, %c0_i32 : i32, i32
  }
  func.func @transform_1(%arg0: i32) -> (i32, i32) {
    %c0_i32 = arith.constant 0 : i32
    %c0_i32_0 = arith.constant 0 : i32
    %c0_i32_1 = arith.constant 0 : i32
    return %c0_i32, %c0_i32_0 : i32, i32
  }
  func.func @transform_2(%arg0: i32) -> (i32, i32) {
    %c0_i32 = arith.constant 0 : i32
    %c0_i32_0 = arith.constant 0 : i32
    %c0_i32_1 = arith.constant 0 : i32
    return %c0_i32, %c0_i32_0 : i32, i32
  }
  func.func @transform_3(%arg0: i32) -> (i32, i32) {
    %c0_i32 = arith.constant 0 : i32
    %c0_i32_0 = arith.constant 0 : i32
    %c0_i32_1 = arith.constant 0 : i32
    return %c0_i32, %c0_i32_0 : i32, i32
  }
  func.func @transform_4(%arg0: i32) -> (i32, i32) {
    %c0_i32 = arith.constant 0 : i32
    %c0_i32_0 = arith.constant 0 : i32
    %c0_i32_1 = arith.constant 0 : i32
    return %c0_i32, %c0_i32_0 : i32, i32
  }
  func.func @transform_5(%arg0: i32) -> (i32, i32) {
    %c0_i32 = arith.constant 0 : i32
    %c0_i32_0 = arith.constant 0 : i32
    return %arg0, %c0_i32 : i32, i32
  }
}

</mosaic_0001>

<llo_original>
// kernel: discriminator_forward.1
$region0: #{discriminator_forward.1}
  #allocation0 [shape = 'u32[]', space=smem, size = 0x4, offset = 0x4, fixed_abs, tag = 'smem constant byte address 0x4 - core index']
  #allocation1 [shape = 'u32[144,128]{1,0:T(1,128)}', space=vmem, size = 0x12000, scoped, tag = 'internal scratch']
  %s0 = inlined_call_operand.vmem [shape: f32[8,32], index: 0, kind: input, shape index: {}]
  %s1 = inlined_call_operand.hbm [shape: bf16[32,256], index: 1, kind: input, shape index: {}]
  %s2 = inlined_call_operand.vmem [shape: f32[1,256], index: 2, kind: input, shape index: {}]
  %s3 = inlined_call_operand.hbm [shape: bf16[256,128], index: 3, kind: input, shape index: {}]
  %s4 = inlined_call_operand.vmem [shape: f32[1,128], index: 4, kind: input, shape index: {}]
  %s5 = inlined_call_operand.vmem [shape: f32[8,128], index: 5, kind: output, shape index: {}]
  %s6 = sld [smem:[#allocation0]]
  $region38: #{discriminator_forward.1} parent=0
    _
  %s8 = ssub.s32 1, %s6
  %s9 = scalar_select 0, %s8, %s6
  $region1: #{discriminator_forward.1} parent=0
    #allocation2 [shape = 'u8[16384]{0}', space=vmem, size = 0x4000, scoped, tag = 'input window, operand 1, single buffered']
    #allocation3 [shape = 's32[1]{0}', space=sflag, size = 0x4, scoped, tag = 'scoped memory for discriminator_forward.1']
    #allocation4 [shape = 'u8[65536]{0}', space=vmem, size = 0x10000, scoped, tag = 'input window, operand 3, single buffered']
    #allocation5 [shape = 's32[1]{0}', space=sflag, size = 0x4, scoped, tag = 'scoped memory for discriminator_forward.1']
    %10 = vsyncpa [#allocation3], 0
    %11 = vsyncpa [#allocation5], 0
    // Predicated region
    $region2: #{discriminator_forward.1} parent=1 // pred_check
      _
    $region3: #{discriminator_forward.1} parent=1 // pred_check_branch
      %13 = sbr.rel (0) target = $region5
    $region4: #{discriminator_forward.1} parent=1 // pred_region
      _
    $region5: #{discriminator_forward.1} parent=1 // pred_fallthru
      _
    // Predicated region
    $region6: #{discriminator_forward.1} parent=1 // pred_check
      _
    $region7: #{discriminator_forward.1} parent=1 // pred_check_branch
      %15 = sbr.rel (0) target = $region9
    $region8: #{discriminator_forward.1} parent=1 // pred_region
      %s17 = ssub.s32 512, 512
      %18 = vsyncadd [#allocation3], %s17
      %s19 = sshll.u32 [#allocation2], 4
      %s20 = int_to_ptr.vmem [resolvable:$true] %s19
      %25 = dma.hbm_to_vmem [thread:$0]  %s1, 512, %s20, [#allocation3], 128, 128, 8
    $region9: #{discriminator_forward.1} parent=1 // pred_fallthru
      _
    // Predicated region
    $region10: #{discriminator_forward.1} parent=1 // pred_check
      _
    $region11: #{discriminator_forward.1} parent=1 // pred_check_branch
      %27 = sbr.rel (0) target = $region13
    $region12: #{discriminator_forward.1} parent=1 // pred_region
      _
    $region13: #{discriminator_forward.1} parent=1 // pred_fallthru
      _
    // Predicated region
    $region14: #{discriminator_forward.1} parent=1 // pred_check
      _
    $region15: #{discriminator_forward.1} parent=1 // pred_check_branch
      %29 = sbr.rel (0) target = $region17
    $region16: #{discriminator_forward.1} parent=1 // pred_region
      %s31 = ssub.s32 2048, 2048
      %32 = vsyncadd [#allocation5], %s31
      %s33 = sshll.u32 [#allocation4], 4
      %s34 = int_to_ptr.vmem [resolvable:$true] %s33
      %39 = dma.hbm_to_vmem [thread:$0]  %s3, 2048, %s34, [#allocation5], 64, 64, 4
    $region17: #{discriminator_forward.1} parent=1 // pred_fallthru
      _
    // Predicated region
    $region18: #{discriminator_forward.1} parent=1 // pred_check
      _
    $region19: #{discriminator_forward.1} parent=1 // pred_check_branch
      %41 = sbr.rel (0) target = $region21
    $region20: #{discriminator_forward.1} parent=1 // pred_region
      _
    $region21: #{discriminator_forward.1} parent=1 // pred_fallthru
      _
    // Predicated region
    $region22: #{discriminator_forward.1} parent=1 // pred_check
      _
    $region23: #{discriminator_forward.1} parent=1 // pred_check_branch
      %43 = sbr.rel (0) target = $region25
    $region24: #{discriminator_forward.1} parent=1 // pred_region
      %44 = dma.done [#allocation3], 512
    $region25: #{discriminator_forward.1} parent=1 // pred_fallthru
      _
    // Predicated region
    $region26: #{discriminator_forward.1} parent=1 // pred_check
      _
    $region27: #{discriminator_forward.1} parent=1 // pred_check_branch
      %46 = sbr.rel (0) target = $region29
    $region28: #{discriminator_forward.1} parent=1 // pred_region
      %47 = dma.done [#allocation5], 2048
    $region29: #{discriminator_forward.1} parent=1 // pred_fallthru
      _
    %v49 = vld [vmem:[%s0] sm:$0xff]
    %v50 = vpack.c.bf16 %v49, %v49
    %v51 = vld [vmem:[#allocation2] sm:$0xff]
    %v52 = vld [vmem:[#allocation2 + $0x8] sm:$0xff]
    %v53 = vld [vmem:[#allocation2 + $0x10] sm:$0xff]
    %v54 = vld [vmem:[#allocation2 + $0x18] sm:$0xff]
    %v55 = vld [vmem:[%s2] sm:$0x3]
    %v57 = vlaneseq
    %v58 = vshrl.u32 %v57, 7
    %v59 = vsub.s32 0, %v58
    %v60 = vrot.slane %v55, %v59
    %v61 = vlaneseq
    %v62 = vshrl.u32 %v61, 7
    %v63 = vsub.s32 1, %v62
    %v64 = vrot.slane %v55, %v63
    %v71 = vunpack.c.l.b16 %v51
    %v72 = vunpack.c.h.b16 %v51
    %v73 = vunpack.c.l.b16 %v52
    %v74 = vunpack.c.h.b16 %v52
    %v75 = vunpack.c.l.b16 %v53
    %v76 = vunpack.c.h.b16 %v53
    %v77 = vunpack.c.l.b16 %v54
    %v78 = vunpack.c.h.b16 %v54
    %v79 = vpack.c.b16 %v73, %v71
    %v80 = vpack.c.b16 %v74, %v72
    %v81 = vpack.c.b16 %v77, %v75
    %v82 = vpack.c.b16 %v78, %v76
    %vm87 = vcmask 261120
    %v89 = vsel %vm87, %v50, 0
    %91 = vmatprep.subr.bf16.mxu0 %v80
    %92 = vmatpush1.bf16.msra.mxu0 %v79
    %93 = vmatprep.subr.bf16.mxu0 %v82
    %94 = vmatpush1.bf16.msra.mxu0 %v81
    %95 = vmatprep.subr.bf16.mxu0 0
    %96 = vmatpush1.bf16.msra.mxu0 0
    %97 = vmatprep.subr.bf16.mxu0 0
    %98 = vmatpush1.bf16.msra.mxu0 0
    %99 = vmatprep.subr.bf16.mxu0 0
    %100 = vmatpush1.bf16.msra.mxu0 0
    %101 = vmatprep.subr.bf16.mxu0 0
    %102 = vmatpush1.bf16.msra.mxu0 0
    %103 = vmatprep.subr.bf16.mxu0 0
    %104 = vmatpush1.bf16.msra.mxu0 0
    %105 = vmatprep.subr.bf16.mxu0 0
    %106 = vmatpush1.bf16.msra.mxu0 0
    %107 = vmatprep.subr.bf16.mxu0 0
    %108 = vmatpush1.bf16.msra.mxu0 0
    %109 = vmatprep.subr.bf16.mxu0 0
    %110 = vmatpush1.bf16.msra.mxu0 0
    %111 = vmatprep.subr.bf16.mxu0 0
    %112 = vmatpush1.bf16.msra.mxu0 0
    %113 = vmatprep.subr.bf16.mxu0 0
    %114 = vmatpush1.bf16.msra.mxu0 0
    %115 = vmatprep.subr.bf16.mxu0 0
    %116 = vmatpush1.bf16.msra.mxu0 0
    %117 = vmatprep.subr.bf16.mxu0 0
    %118 = vmatpush1.bf16.msra.mxu0 0
    %119 = vmatprep.subr.bf16.mxu0 0
    %120 = vmatpush1.bf16.msra.mxu0 0
    %121 = vmatprep.subr.bf16.mxu0 0
    %122 = vmatpush1.bf16.msra.mxu0 0
    %123 = vmatprep.mubr.bf16.mxu0 0
    %124 = vmatmul.mubr.bf16.gmra.mrb[0].mxu0 %v89
    %v125 = vpop.f32.mrb[0].mxu0
    %v126 = vadd.f32 %v60, %v125
    %v127 = vpop.f32.mrb[0].mxu0
    %v128 = vadd.f32 %v64, %v127
    %v129 = vpop.f32.mrb[0].mxu0
    %v130 = vpop.f32.mrb[0].mxu0
    %131 = vdwg.mxu0
    %vm132 = vcmp.ge.f32.partialorder %v126, 0.0
    %vm133 = vcmp.ge.f32.partialorder %v128, 0.0
    %v134 = vmul.f32 %v126, 0.01
    %v135 = vmul.f32 %v128, 0.01
    %v136 = vsel %vm132, %v126, %v134
    %v137 = vsel %vm133, %v128, %v135
    %v138 = vpack.c.bf16 %v136, %v136
    %v139 = vpack.c.bf16 %v137, %v137
    %v140 = vld [vmem:[#allocation4] sm:$0xf]
    %v141 = vld [vmem:[#allocation4 + $0x4] sm:$0xf]
    %v142 = vld [vmem:[#allocation4 + $0x8] sm:$0xf]
    %v143 = vld [vmem:[#allocation4 + $0xc] sm:$0xf]
    %v144 = vld [vmem:[#allocation4 + $0x10] sm:$0xf]
    %v145 = vld [vmem:[#allocation4 + $0x14] sm:$0xf]
    %v146 = vld [vmem:[#allocation4 + $0x18] sm:$0xf]
    %v147 = vld [vmem:[#allocation4 + $0x1c] sm:$0xf]
    %v148 = vld [vmem:[#allocation4 + $0x20] sm:$0xf]
    %v149 = vld [vmem:[#allocation4 + $0x24] sm:$0xf]
    %v150 = vld [vmem:[#allocation4 + $0x28] sm:$0xf]
    %v151 = vld [vmem:[#allocation4 + $0x2c] sm:$0xf]
    %v152 = vld [vmem:[#allocation4 + $0x30] sm:$0xf]
    %v153 = vld [vmem:[#allocation4 + $0x34] sm:$0xf]
    %v154 = vld [vmem:[#allocation4 + $0x38] sm:$0xf]
    %v155 = vld [vmem:[#allocation4 + $0x3c] sm:$0xf]
    %v156 = vld [vmem:[#allocation4 + $0x40] sm:$0xf]
    %v157 = vld [vmem:[#allocation4 + $0x44] sm:$0xf]
    %v158 = vld [vmem:[#allocation4 + $0x48] sm:$0xf]
    %v159 = vld [vmem:[#allocation4 + $0x4c] sm:$0xf]
    %v160 = vld [vmem:[#allocation4 + $0x50] sm:$0xf]
    %v161 = vld [vmem:[#allocation4 + $0x54] sm:$0xf]
    %v162 = vld [vmem:[#allocation4 + $0x58] sm:$0xf]
    %v163 = vld [vmem:[#allocation4 + $0x5c] sm:$0xf]
    %v164 = vld [vmem:[#allocation4 + $0x60] sm:$0xf]
    %v165 = vld [vmem:[#allocation4 + $0x64] sm:$0xf]
    %v166 = vld [vmem:[#allocation4 + $0x68] sm:$0xf]
    %v167 = vld [vmem:[#allocation4 + $0x6c] sm:$0xf]
    %v168 = vld [vmem:[#allocation4 + $0x70] sm:$0xf]
    %v169 = vld [vmem:[#allocation4 + $0x74] sm:$0xf]
    %v170 = vld [vmem:[#allocation4 + $0x78] sm:$0xf]
    %v171 = vld [vmem:[#allocation4 + $0x7c] sm:$0xf]
    %v172 = vld [vmem:[%s4] sm:$0x1]
    %v174 = vlaneseq
    %v175 = vshrl.u32 %v174, 7
    %v176 = vsub.s32 0, %v175
    %v177 = vrot.slane %v172, %v176
    %v211 = vunpack.c.l.b16 %v140
    %v212 = vunpack.c.l.b16 %v141
    %v213 = vunpack.c.l.b16 %v142
    %v214 = vunpack.c.l.b16 %v143
    %v215 = vunpack.c.l.b16 %v144
    %v216 = vunpack.c.l.b16 %v145
    %v217 = vunpack.c.l.b16 %v146
    %v218 = vunpack.c.l.b16 %v147
    %v219 = vunpack.c.l.b16 %v148
    %v220 = vunpack.c.l.b16 %v149
    %v221 = vunpack.c.l.b16 %v150
    %v222 = vunpack.c.l.b16 %v151
    %v223 = vunpack.c.l.b16 %v152
    %v224 = vunpack.c.l.b16 %v153
    %v225 = vunpack.c.l.b16 %v154
    %v226 = vunpack.c.l.b16 %v155
    %v227 = vunpack.c.l.b16 %v156
    %v228 = vunpack.c.l.b16 %v157
    %v229 = vunpack.c.l.b16 %v158
    %v230 = vunpack.c.l.b16 %v159
    %v231 = vunpack.c.l.b16 %v160
    %v232 = vunpack.c.l.b16 %v161
    %v233 = vunpack.c.l.b16 %v162
    %v234 = vunpack.c.l.b16 %v163
    %v235 = vunpack.c.l.b16 %v164
    %v236 = vunpack.c.l.b16 %v165
    %v237 = vunpack.c.l.b16 %v166
    %v238 = vunpack.c.l.b16 %v167
    %v239 = vunpack.c.l.b16 %v168
    %v240 = vunpack.c.l.b16 %v169
    %v241 = vunpack.c.l.b16 %v170
    %v242 = vunpack.c.l.b16 %v171
    %v243 = vpack.c.b16 %v212, %v211
    %v244 = vpack.c.b16 %v214, %v213
    %v245 = vpack.c.b16 %v216, %v215
    %v246 = vpack.c.b16 %v218, %v217
    %v247 = vpack.c.b16 %v220, %v219
    %v248 = vpack.c.b16 %v222, %v221
    %v249 = vpack.c.b16 %v224, %v223
    %v250 = vpack.c.b16 %v226, %v225
    %v251 = vpack.c.b16 %v228, %v227
    %v252 = vpack.c.b16 %v230, %v229
    %v253 = vpack.c.b16 %v232, %v231
    %v254 = vpack.c.b16 %v234, %v233
    %v255 = vpack.c.b16 %v236, %v235
    %v256 = vpack.c.b16 %v238, %v237
    %v257 = vpack.c.b16 %v240, %v239
    %v258 = vpack.c.b16 %v242, %v241
    %275 = vmatprep.subr.bf16.mxu0 0
    %276 = vmatpush1.bf16.msra.mxu0 %v243
    %277 = vmatprep.subr.bf16.mxu0 0
    %278 = vmatpush1.bf16.msra.mxu0 %v244
    %279 = vmatprep.subr.bf16.mxu0 0
    %280 = vmatpush1.bf16.msra.mxu0 %v245
    %281 = vmatprep.subr.bf16.mxu0 0
    %282 = vmatpush1.bf16.msra.mxu0 %v246
    %283 = vmatprep.subr.bf16.mxu0 0
    %284 = vmatpush1.bf16.msra.mxu0 %v247
    %285 = vmatprep.subr.bf16.mxu0 0
    %286 = vmatpush1.bf16.msra.mxu0 %v248
    %287 = vmatprep.subr.bf16.mxu0 0
    %288 = vmatpush1.bf16.msra.mxu0 %v249
    %289 = vmatprep.subr.bf16.mxu0 0
    %290 = vmatpush1.bf16.msra.mxu0 %v250
    %291 = vmatprep.subr.bf16.mxu0 0
    %292 = vmatpush1.bf16.msra.mxu0 %v251
    %293 = vmatprep.subr.bf16.mxu0 0
    %294 = vmatpush1.bf16.msra.mxu0 %v252
    %295 = vmatprep.subr.bf16.mxu0 0
    %296 = vmatpush1.bf16.msra.mxu0 %v253
    %297 = vmatprep.subr.bf16.mxu0 0
    %298 = vmatpush1.bf16.msra.mxu0 %v254
    %299 = vmatprep.subr.bf16.mxu0 0
    %300 = vmatpush1.bf16.msra.mxu0 %v255
    %301 = vmatprep.subr.bf16.mxu0 0
    %302 = vmatpush1.bf16.msra.mxu0 %v256
    %303 = vmatprep.subr.bf16.mxu0 0
    %304 = vmatpush1.bf16.msra.mxu0 %v257
    %305 = vmatprep.subr.bf16.mxu0 0
    %306 = vmatpush1.bf16.msra.mxu0 %v258
    %307 = vmatprep.mubr.bf16.mxu0 %v139
    %308 = vmatmul.mubr.bf16.gmra.mrb[0].mxu0 %v138
    %v309 = vpop.f32.mrb[0].mxu0
    %v310 = vadd.f32 %v177, %v309
    %v311 = vpop.f32.mrb[0].mxu0
    %v312 = vpop.f32.mrb[0].mxu0
    %v313 = vpop.f32.mrb[0].mxu0
    %314 = vdwg.mxu0
    %315 = vmax.xlane.f32.xlu0 %v310
    %v316 = vpop.xlane.xlu0 %315
    %v317 = vsub.f32 %v310, %v316
    %v318 = vmul.f32 %v317, 1.442695
    %v319 = vpow.pop %v318
    %320 = vadd.xlane.f32.xlu0 %v319
    %v321 = vpop.xlane.xlu0 %320
    %v322 = vrcp.pop %v321
    %v323 = vmul.f32 %v319, %v322
    %324 = vst [vmem:[%s5] sm:$0xff] %v323
    // Predicated region
    $region30: #{discriminator_forward.1} parent=1 // pred_check
      _
    $region31: #{discriminator_forward.1} parent=1 // pred_check_branch
      %326 = sbr.rel (0) target = $region33
    $region32: #{discriminator_forward.1} parent=1 // pred_region
      _
    $region33: #{discriminator_forward.1} parent=1 // pred_fallthru
      _
    // Predicated region
    $region34: #{discriminator_forward.1} parent=1 // pred_check
      _
    $region35: #{discriminator_forward.1} parent=1 // pred_check_branch
      %328 = sbr.rel (0) target = $region37
    $region36: #{discriminator_forward.1} parent=1 // pred_region
      _
    $region37: #{discriminator_forward.1} parent=1 // pred_fallthru
      _
    %329 = vsyncpa [#allocation3], 1
    %330 = vsyncpa [#allocation5], 1

</llo_original>
